<compile_context>
chip_gen: v7x
topology: tpu7x:2x2x1
jax: 0.10.0
libtpu: 0.0.40
codegen_flags: <defaults>
</compile_context>

<pallas_src>
import functools

import jax
import jax.numpy as jnp
from jax.experimental import pallas as pl
from jax.experimental.pallas import tpu as pltpu


def _grad3d_kernel(y_ref, out_ref, carry_ref, *,
                   penalty, H, W, Dp, tD, nD, mask_d):
    """One (tG, tD, H*W) block -> (1, 1, 8, 128) partial sums [dy, dx, dz]."""
    j = pl.program_id(1)                  # D-tile index (innermost, in-order)
    HW = H * W
    v = y_ref[...]                        # (tG, tD, HW), input dtype
    f32 = jnp.float32

    def diff(a, b):                       # cast folded into each diff
        return a.astype(f32) - b.astype(f32)

    def energy(d):                        # l2 squares the raw difference
        return d * d if penalty == 'l2' else jnp.abs(d)

    if mask_d:                            # only for a partial last D tile
        didx = j * tD + jax.lax.broadcasted_iota(jnp.int32, (1, tD, 1), 1)
        plane_ok = didx < Dp              # (1, tD, 1)

    # ---- D-direction ("dy"): pairs inside this D tile ----------------------
    s_dy = f32(0.0)
    if tD >= 2:
        e = energy(diff(v[:, 1:, :], v[:, :-1, :]))
        if mask_d:
            e = jnp.where(plane_ok[:, 1:, :], e, 0.0)
        s_dy = jnp.sum(e)
    # Pair straddling the previous D tile (carried last plane, f32).
    if nD > 1:
        e_b = jnp.sum(energy(diff(v[:, 0, :], carry_ref[...])))
        s_dy = s_dy + jnp.where(j > 0, e_b, 0.0)   # j == 0: carry not valid
        carry_ref[...] = v[:, tD - 1, :].astype(f32)

    # ---- H-direction ("dx"): shift by W along the folded lane axis ---------
    s_dx = f32(0.0)
    if H >= 2:
        e = energy(diff(v[:, :, W:], v[:, :, :-W]))
        if mask_d:
            e = jnp.where(plane_ok, e, 0.0)
        s_dx = jnp.sum(e)

    # ---- W-direction ("dz"): shift by 1, mask pairs crossing a row end -----
    s_dz = f32(0.0)
    if W >= 2:
        lane = jax.lax.broadcasted_iota(jnp.int32, (1, 1, HW - 1), 2)
        ok = (lane % W) != (W - 1)        # static; % W lowers to AND for pow2 W
        if mask_d:
            ok = jnp.logical_and(ok, plane_ok)
        s_dz = jnp.sum(jnp.where(ok, energy(diff(v[:, :, 1:], v[:, :, :-1])),
                                 0.0))

    # ---- full (8, 128) partial-sum store: rows 0..2 = dy, dx, dz ------------
    row = jax.lax.broadcasted_iota(jnp.int32, (8, 128), 0)
    out_ref[0, 0, :, :] = jnp.where(
        row == 0, s_dy,
        jnp.where(row == 1, s_dx, jnp.where(row == 2, s_dz, 0.0)))


def _largest_divisor_leq(n, cap):
    cap = int(max(1, min(n, cap)))
    for d in range(cap, 0, -1):
        if n % d == 0:
            return d
    return 1


def _choose_tiles(Gp, Dp, HW, block_bytes):
    """Pick (tG, tD, mask_d) for the folded (Gp, Dp, HW) view."""
    plane_f32 = HW * 4                    # f32 accounting for in-kernel temps
    vol_f32 = Dp * plane_f32
    if vol_f32 <= block_bytes:
        # Whole (folded) volumes per block; batch as many as fit, but keep
        # >= 2 blocks on the parallel G axis so both v7x TensorCores get work.
        tD = Dp
        cap = max(1, block_bytes // vol_f32)
        if Gp >= 2:
            cap = min(cap, max(1, Gp // 2))
        tG = _largest_divisor_leq(Gp, cap)
        return tG, tD, False
    # D must be tiled; one volume-slab per block along G.
    if Dp <= 8:
        return 1, Dp, False               # tiny D: small whole-D slab is safe
    cap_planes = max(8, (block_bytes // plane_f32) // 8 * 8)
    exact = [d for d in range(8, min(Dp, cap_planes) + 1, 8) if Dp % d == 0]
    if exact:
        return 1, max(exact), False
    # No exact multiple-of-8 divisor fits: cdiv grid with a masked last tile.
    # TODO(synk): for extreme H*W (e.g. 512x512) even 8 planes overshoot
    # block_bytes; a lane-axis (H*W) tiling would be needed there.
    return 1, min(cap_planes, max(8, (Dp // 8) * 8)), True


def _tpu_budgets():
    """(block_bytes, vmem_limit_bytes) sized to the current TPU generation."""
    vmem_cap = None
    try:
        info = pltpu.get_tpu_info()
        vmem_cap = getattr(info, "vmem_capacity_bytes", None)
    except Exception:
        vmem_cap = None
    if vmem_cap is None:
        vmem_cap = 64 * 1024 * 1024       # conservative fallback (v7x floor)
    if vmem_cap >= 96 * 1024 * 1024:      # v5e / v6e: 128 MiB physical VMEM
        return 4 * 1024 * 1024, 64 * 1024 * 1024
    return 2 * 1024 * 1024, 32 * 1024 * 1024      # v7x: 64 MiB physical VMEM


@functools.partial(jax.jit, static_argnames=("penalty", "loss_mult",
                                              "block_bytes", "vmem_limit"))
def _grad3d_impl(y_pred, penalty, loss_mult, block_bytes, vmem_limit):
    N, C, D, H, W = y_pred.shape
    G, HW = N * C, H * W

    # Fold D 2-way into the parallel G axis when G == 1 so a megacore part
    # (v7x) still gets >= 2 independent grid blocks; the single fold-boundary
    # pair per volume is fixed up below with a thin (2-plane) JAX-side read.
    kD = 2 if (G == 1 and D >= 4 and D % 2 == 0) else 1
    Gp, Dp = G * kD, D // kD
    y_fold = y_pred.reshape(Gp, Dp, HW)   # free, lane-dense view

    tG, tD, mask_d = _choose_tiles(Gp, Dp, HW, block_bytes)
    nG = Gp // tG
    nD = pl.cdiv(Dp, tD)

    kernel = functools.partial(_grad3d_kernel, penalty=penalty, H=H, W=W,
                               Dp=Dp, tD=tD, nD=nD, mask_d=mask_d)
    partials = pl.pallas_call(
        kernel,
        out_shape=jax.ShapeDtypeStruct((nG, nD, 8, 128), jnp.float32),
        grid=(nG, nD),
        in_specs=[pl.BlockSpec((tG, tD, HW), lambda i, j: (i, j, 0))],
        out_specs=pl.BlockSpec((1, 1, 8, 128), lambda i, j: (i, j, 0, 0)),
        scratch_shapes=[pltpu.VMEM((tG, HW), jnp.float32)],   # carried plane
        compiler_params=pltpu.CompilerParams(
            dimension_semantics=("parallel", "arbitrary"),
            vmem_limit_bytes=vmem_limit),
    )(y_fold)

    sums = jnp.sum(partials[:, :, :3, 0], axis=(0, 1))   # (3,) = [dy, dx, dz]
    s_dy, s_dx, s_dz = sums[0], sums[1], sums[2]

    if kD > 1:
        # D pairs straddling a fold boundary: 2*(kD-1) thin plane reads.
        a = y_fold[:, Dp - 1, :].reshape(G, kD, HW)[:, :-1, :].astype(jnp.float32)
        b = y_fold[:, 0, :].reshape(G, kD, HW)[:, 1:, :].astype(jnp.float32)
        db = b - a
        s_dy = s_dy + (jnp.sum(db * db) if penalty == 'l2'
                       else jnp.sum(jnp.abs(db)))

    # Element counts of each torch.mean().  (A size-1 spatial dim gives a zero
    # count -> nan, intentionally mirroring torch.mean over an empty tensor.)
    n_dy = G * (D - 1) * H * W
    n_dx = G * D * (H - 1) * W
    n_dz = G * D * H * (W - 1)
    d = s_dx / n_dx + s_dy / n_dy + s_dz / n_dz
    grad = d / 3.0
    if loss_mult is not None:
        grad = grad * loss_mult
    return grad


def grad3d_loss(y_pred, penalty='l1', loss_mult=None, block_bytes=None):
    """Pallas implementation of Grad3d(penalty, loss_mult).forward(_, y_pred)."""
    default_bb, vmem_limit = _tpu_budgets()
    bb = int(block_bytes) if block_bytes is not None else default_bb
    return _grad3d_impl(y_pred, penalty, loss_mult, bb, vmem_limit)


def _grad3d_ref(y_pred, penalty='l1', loss_mult=None):
    # Pure-JAX reference mirroring the PyTorch module.
    v = y_pred.astype(jnp.float32)
    dy = jnp.abs(v[:, :, 1:, :, :] - v[:, :, :-1, :, :])
    dx = jnp.abs(v[:, :, :, 1:, :] - v[:, :, :, :-1, :])
    dz = jnp.abs(v[:, :, :, :, 1:] - v[:, :, :, :, :-1])
    if penalty == 'l2':
        dy, dx, dz = dy * dy, dx * dx, dz * dz
    d = jnp.mean(dx) + jnp.mean(dy) + jnp.mean(dz)
    grad = d / 3.0
    if loss_mult is not None:
        grad = grad * loss_mult
    return grad


if __name__ == "__main__":
    key = jax.random.PRNGKey(0)
    k1, k2, k3, k4 = jax.random.split(key, 4)

    # Small shapes consistent with the module layout (N, C, D, H, W).
    y_a = jax.random.normal(k1, (2, 4, 8, 16, 16), dtype=jnp.float32)   # G=8
    y_b = jax.random.normal(k2, (1, 2, 32, 16, 16), dtype=jnp.float32)  # D tiling
    y_c = jax.random.normal(k3, (1, 1, 12, 16, 16), dtype=jnp.float32)  # G==1 fold
    y_d = jax.random.normal(k4, (1, 2, 20, 16, 16), dtype=jnp.float32)  # masked tile
    y_a_bf16 = y_a.astype(jnp.bfloat16)

    cases = [
        # (input, penalty, loss_mult, block_bytes override)
        (y_a, 'l1', None, None),        # generation-default block size
        (y_a, 'l2', 2.0, None),         # l2 + loss_mult
        (y_a, 'l1', None, 8 * 1024),    # many G blocks (grid 8x1)
        (y_b, 'l1', None, 16 * 1024),   # D tiled 2x -> in-kernel carried halo
        (y_b, 'l2', 0.5, 16 * 1024),    # D tiled, l2
        (y_c, 'l1', None, None),        # G==1 -> 2-way D fold + thin correction
        (y_d, 'l1', None, 8 * 1024),    # cdiv D grid, masked last tile + carry
        (y_a_bf16, 'l1', None, None),   # bf16 stays bf16 through the DMA
    ]
    for y, penalty, mult, bb in cases:
        out = jax.block_until_ready(
            grad3d_loss(y, penalty=penalty, loss_mult=mult, block_bytes=bb))
        ref = _grad3d_ref(y, penalty=penalty, loss_mult=mult)
        assert jnp.allclose(out, ref, rtol=3e-5, atol=1e-6), (
            penalty, mult, bb, float(out), float(ref))

    print("KERNEL_OK")
</pallas_src>

<mosaic_0001>
module attributes {stable_mosaic.version = 11 : i64} {
  func.func @_grad3d_kernel(%arg0: i32, %arg1: i32, %arg2: memref<4x8x256xf32, #tpu.memory_space<vmem>>, %arg3: memref<1x1x8x128xf32, #tpu.memory_space<vmem>>, %arg4: memref<4x256xf32, #tpu.memory_space<vmem>>) attributes {dimension_semantics = [#tpu.dimension_semantics<parallel>, #tpu.dimension_semantics<arbitrary>], iteration_bounds = array<i64: 2, 1>, scalar_prefetch = 0 : i64, scratch_operands = 1 : i64, tpu.core_type = #tpu.core_type<tc>, window_params = [{transform_indices = @transform_0, window_bounds = array<i64: 4, 8, 256>}, {transform_indices = @transform_1, window_bounds = array<i64: 1, 1, 8, 128>}]} {
    %c0 = arith.constant 0 : index
    %c0_0 = arith.constant 0 : index
    %c0_1 = arith.constant 0 : index
    %0 = vector.load %arg2[%c0, %c0_0, %c0_1] : memref<4x8x256xf32, #tpu.memory_space<vmem>>, vector<4x8x256xf32>
    %1 = vector.extract_strided_slice %0 {offsets = [0, 1, 0], sizes = [4, 7, 256], strides = [1, 1, 1]} : vector<4x8x256xf32> to vector<4x7x256xf32>
    %2 = vector.extract_strided_slice %0 {offsets = [0, 0, 0], sizes = [4, 7, 256], strides = [1, 1, 1]} : vector<4x8x256xf32> to vector<4x7x256xf32>
    %3 = arith.subf %1, %2 : vector<4x7x256xf32>
    %4 = math.absf %3 : vector<4x7x256xf32>
    %5 = vector.shape_cast %4 : vector<4x7x256xf32> to vector<1x4x7x256xf32>
    %cst = arith.constant dense<0.000000e+00> : vector<1xf32>
    %6 = vector.multi_reduction <add>, %5, %cst [1, 2, 3] : vector<1x4x7x256xf32> to vector<1xf32>
    %7 = vector.shape_cast %6 : vector<1xf32> to vector<1x1x1x1xf32>
    %8 = vector.extract %7[0, 0, 0, 0] : f32 from vector<1x1x1x1xf32>
    %9 = vector.extract_strided_slice %0 {offsets = [0, 0, 16], sizes = [4, 8, 240], strides = [1, 1, 1]} : vector<4x8x256xf32> to vector<4x8x240xf32>
    %10 = vector.extract_strided_slice %0 {offsets = [0, 0, 0], sizes = [4, 8, 240], strides = [1, 1, 1]} : vector<4x8x256xf32> to vector<4x8x240xf32>
    %11 = arith.subf %9, %10 : vector<4x8x240xf32>
    %12 = math.absf %11 : vector<4x8x240xf32>
    %13 = vector.shape_cast %12 : vector<4x8x240xf32> to vector<1x4x8x240xf32>
    %cst_2 = arith.constant dense<0.000000e+00> : vector<1xf32>
    %14 = vector.multi_reduction <add>, %13, %cst_2 [1, 2, 3] : vector<1x4x8x240xf32> to vector<1xf32>
    %15 = vector.shape_cast %14 : vector<1xf32> to vector<1x1x1x1xf32>
    %16 = vector.extract %15[0, 0, 0, 0] : f32 from vector<1x1x1x1xf32>
    %17 = tpu.iota {dimensions = array<i32: 2>} : vector<1x1x255xi32>
    %c16_i32 = arith.constant 16 : i32
    %c0_i32 = arith.constant 0 : i32
    %18 = arith.cmpi eq, %c16_i32, %c0_i32 : i32
    %c1_i32 = arith.constant 1 : i32
    %19 = arith.select %18, %c1_i32, %c16_i32 : i32
    %20 = vector.broadcast %19 : i32 to vector<1x1x255xi32>
    %21 = arith.remsi %17, %20 : vector<1x1x255xi32>
    %c0_i32_3 = arith.constant 0 : i32
    %22 = vector.broadcast %c0_i32_3 : i32 to vector<1x1x255xi32>
    %23 = arith.cmpi ne, %21, %22 : vector<1x1x255xi32>
    %c0_i32_4 = arith.constant 0 : i32
    %24 = vector.broadcast %c0_i32_4 : i32 to vector<1x1x255xi32>
    %25 = arith.cmpi slt, %21, %24 : vector<1x1x255xi32>
    %c0_i32_5 = arith.constant 0 : i32
    %26 = arith.cmpi slt, %19, %c0_i32_5 : i32
    %27 = vector.broadcast %26 : i1 to vector<1x1x255xi1>
    %28 = vector.broadcast %27 : vector<1x1x255xi1> to vector<1x1x255xi1>
    %29 = arith.xori %25, %28 : vector<1x1x255xi1>
    %30 = arith.andi %29, %23 : vector<1x1x255xi1>
    %31 = vector.broadcast %19 : i32 to vector<1x1x255xi32>
    %32 = arith.addi %21, %31 : vector<1x1x255xi32>
    %33 = arith.select %30, %32, %21 : vector<1x1x255xi1>, vector<1x1x255xi32>
    %c15_i32 = arith.constant 15 : i32
    %34 = vector.broadcast %c15_i32 : i32 to vector<1x1x255xi32>
    %35 = arith.cmpi ne, %33, %34 : vector<1x1x255xi32>
    %36 = vector.extract_strided_slice %0 {offsets = [0, 0, 1], sizes = [4, 8, 255], strides = [1, 1, 1]} : vector<4x8x256xf32> to vector<4x8x255xf32>
    %37 = vector.extract_strided_slice %0 {offsets = [0, 0, 0], sizes = [4, 8, 255], strides = [1, 1, 1]} : vector<4x8x256xf32> to vector<4x8x255xf32>
    %38 = arith.subf %36, %37 : vector<4x8x255xf32>
    %39 = math.absf %38 : vector<4x8x255xf32>
    %cst_6 = arith.constant 0.000000e+00 : f32
    %40 = vector.shape_cast %35 : vector<1x1x255xi1> to vector<1x1x255xi1>
    %41 = vector.broadcast %40 : vector<1x1x255xi1> to vector<4x8x255xi1>
    %42 = vector.broadcast %cst_6 : f32 to vector<4x8x255xf32>
    %43 = arith.select %41, %39, %42 : vector<4x8x255xi1>, vector<4x8x255xf32>
    %44 = vector.shape_cast %43 : vector<4x8x255xf32> to vector<1x4x8x255xf32>
    %cst_7 = arith.constant dense<0.000000e+00> : vector<1xf32>
    %45 = vector.multi_reduction <add>, %44, %cst_7 [1, 2, 3] : vector<1x4x8x255xf32> to vector<1xf32>
    %46 = vector.shape_cast %45 : vector<1xf32> to vector<1x1x1x1xf32>
    %47 = vector.extract %46[0, 0, 0, 0] : f32 from vector<1x1x1x1xf32>
    %48 = tpu.iota {dimensions = array<i32: 0>} : vector<8x128xi32>
    %c0_i32_8 = arith.constant 0 : i32
    %49 = vector.broadcast %c0_i32_8 : i32 to vector<8x128xi32>
    %50 = arith.cmpi eq, %48, %49 : vector<8x128xi32>
    %c1_i32_9 = arith.constant 1 : i32
    %51 = vector.broadcast %c1_i32_9 : i32 to vector<8x128xi32>
    %52 = arith.cmpi eq, %48, %51 : vector<8x128xi32>
    %c2_i32 = arith.constant 2 : i32
    %53 = vector.broadcast %c2_i32 : i32 to vector<8x128xi32>
    %54 = arith.cmpi eq, %48, %53 : vector<8x128xi32>
    %cst_10 = arith.constant 0.000000e+00 : f32
    %55 = vector.broadcast %47 : f32 to vector<8x128xf32>
    %56 = vector.broadcast %cst_10 : f32 to vector<8x128xf32>
    %57 = arith.select %54, %55, %56 : vector<8x128xi1>, vector<8x128xf32>
    %58 = vector.broadcast %16 : f32 to vector<8x128xf32>
    %59 = arith.select %52, %58, %57 : vector<8x128xi1>, vector<8x128xf32>
    %60 = vector.broadcast %8 : f32 to vector<8x128xf32>
    %61 = arith.select %50, %60, %59 : vector<8x128xi1>, vector<8x128xf32>
    %c0_11 = arith.constant 0 : index
    %c0_12 = arith.constant 0 : index
    %c0_13 = arith.constant 0 : index
    %c0_14 = arith.constant 0 : index
    %62 = vector.load %arg3[%c0_11, %c0_12, %c0_13, %c0_14] : memref<1x1x8x128xf32, #tpu.memory_space<vmem>>, vector<1x1x8x128xf32>
    %63 = vector.shape_cast %62 : vector<1x1x8x128xf32> to vector<8x128xf32>
    %64 = vector.shape_cast %61 : vector<8x128xf32> to vector<1x1x8x128xf32>
    tpu.vector_store %arg3[%c0_11, %c0_12, %c0_13, %c0_14], %64 {strides = array<i32>} : memref<1x1x8x128xf32, #tpu.memory_space<vmem>>, vector<1x1x8x128xf32>,
    return
  }
  func.func @transform_0(%arg0: i32, %arg1: i32) -> (i32, i32, i32) {
    %c0_i32 = arith.constant 0 : i32
    %c0_i32_0 = arith.constant 0 : i32
    return %arg0, %arg1, %c0_i32 : i32, i32, i32
  }
  func.func @transform_1(%arg0: i32, %arg1: i32) -> (i32, i32, i32, i32) {
    %c0_i32 = arith.constant 0 : i32
    %c0_i32_0 = arith.constant 0 : i32
    %c0_i32_1 = arith.constant 0 : i32
    return %arg0, %arg1, %c0_i32, %c0_i32_0 : i32, i32, i32, i32
  }
}

</mosaic_0001>

<llo_original>
// kernel: _grad3d_impl.1
$region0: #{_grad3d_impl.1}
  #allocation0 [shape = 'u32[]', space=smem, size = 0x4, offset = 0x4, fixed_abs, tag = 'smem constant byte address 0x4 - core index']
  #allocation1 [shape = 'u32[144,128]{1,0:T(1,128)}', space=vmem, size = 0x12000, scoped, tag = 'internal scratch']
  #allocation2 [shape = 'f32[4,256]{1,0:T(4,128)}', space=vmem, size = 0x1000, scoped, tag = 'scratch operand']
  %s0 = inlined_call_operand.vmem [shape: f32[8,8,256], index: 0, kind: input, shape index: {}]
  %s1 = inlined_call_operand.vmem [shape: f32[2,1,8,128], index: 1, kind: output, shape index: {}]
  %s2 = sld [smem:[#allocation0]]
  $region37: #{_grad3d_impl.1} parent=0
    _
  %s4 = ssub.s32 1, %s2
  %s5 = scalar_select 0, %s4, %s2
  loop: start=0, step=1, limit=4
  $region2: #{_grad3d_impl.1} parent=0 // loop_pre_header
    _
  $region3: #{_grad3d_impl.1} parent=0 // loop_header
    %s7 = sphi 0, %s11
    %p8 = scmp.ge.s32.totalorder %s7, 4
    %s14 = sphi 0, %s26
    %s15 = sphi 0, %s22
    %s16 = sphi 0, %s14
    %s17 = sphi 0, %s15
    %s18 = sphi 0, %s16
    %s19 = sphi 0, %s17
    %s31 = sphi 0, %s33
    %s34 = sphi 0, %s31
    %s35 = sphi 0, %s34
    %s51 = sphi 0, %s35
    %s59 = sphi 0, %s61
    %s62 = sphi 0, %s59
    %s63 = sphi 0, %s62
    %s79 = sphi 0, %s63
  $region4: #{_grad3d_impl.1} parent=0 // loop_header_branch
    %10 = sbr.rel (%p8) target = $region8
  $region5: #{_grad3d_impl.1} parent=0 // loop_body
    %s12 = ssub.s32 %s7, 1
    %s13 = ssub.s32 %s7, 2
    %s20 = sadd.s32 1, %s15
    %p21 = scmp.ge.s32.totalorder %s20, 1
    %s22 = scalar_select %p21, 0, %s20
    %s23 = sadd.s32 1, %s14
    %s24 = scalar_select %p21, %s23, %s14
    %p25 = scmp.ge.s32.totalorder %s24, 2
    %s26 = scalar_select %p25, 0, %s24
    %s27 = ssub.s32 %s14, %s26
    %s28 = ssub.s32 %s15, %s22
    %s29 = sor.u32 %s27, %s28
    %p30 = scmp.eq.s32.totalorder %s29, 0
    %s32 = sadd.s32 %s31, 1
    %s33 = scalar_select %p30, %s31, %s32
    %p36 = pneg %p30
    %p37 = scmp.eq.s32.totalorder %s7, 1
    %p38 = por %p36, %p37
    %p39 = scmp.ne.s32.totalorder %s31, %s34
    %p40 = scmp.eq.s32.totalorder %s7, 0
    %p41 = por %p39, %p40
    %p42 = scmp.ne.s32.totalorder %s31, %s34
    %p43 = scmp.eq.s32.totalorder %s12, 1
    %p44 = por %p42, %p43
    %p45 = scmp.ne.s32.totalorder %s34, %s35
    %p46 = scmp.eq.s32.totalorder %s12, 0
    %p47 = por %p45, %p46
    %p48 = scmp.ne.s32.totalorder %s34, %s35
    %p49 = scmp.eq.s32.totalorder %s13, 1
    %p50 = por %p48, %p49
    %p52 = scmp.ne.s32.totalorder %s35, %s51
    %p53 = scmp.eq.s32.totalorder %s13, 0
    %p54 = por %p52, %p53
    %s55 = ssub.s32 %s14, %s26
    %s56 = ssub.s32 %s15, %s22
    %s57 = sor.u32 %s55, %s56
    %p58 = scmp.eq.s32.totalorder %s57, 0
    %s60 = sadd.s32 %s59, 1
    %s61 = scalar_select %p58, %s59, %s60
    %p64 = pneg %p58
    %p65 = scmp.eq.s32.totalorder %s7, 1
    %p66 = por %p64, %p65
    %p67 = scmp.ne.s32.totalorder %s59, %s62
    %p68 = scmp.eq.s32.totalorder %s7, 0
    %p69 = por %p67, %p68
    %p70 = scmp.ne.s32.totalorder %s59, %s62
    %p71 = scmp.eq.s32.totalorder %s12, 1
    %p72 = por %p70, %p71
    %p73 = scmp.ne.s32.totalorder %s62, %s63
    %p74 = scmp.eq.s32.totalorder %s12, 0
    %p75 = por %p73, %p74
    %p76 = scmp.ne.s32.totalorder %s62, %s63
    %p77 = scmp.eq.s32.totalorder %s13, 1
    %p78 = por %p76, %p77
    %p80 = scmp.ne.s32.totalorder %s63, %s79
    %p81 = scmp.eq.s32.totalorder %s13, 0
    %p82 = por %p80, %p81
    %p83 = scmp.le.s32.totalorder 1, %s7
    %p84 = scmp.lt.s32.totalorder %s7, 3
    %p85 = pnand %p83, %p84
    %p86 = pneg %p85
    // Predicated region
    $region9: #{_grad3d_impl.1} parent=5 // pred_check
      _
    $region10: #{_grad3d_impl.1} parent=5 // pred_check_branch
      %88 = sbr.rel (%p85) target = $region12
    $region11: #{_grad3d_impl.1} parent=5 // pred_region
      %s89 = ssub.s32 %s7, 1
    $region12: #{_grad3d_impl.1} parent=5 // pred_fallthru
      _
    %p90 = scmp.lt.s32.totalorder %s7, 2
    // Predicated region
    $region13: #{_grad3d_impl.1} parent=5 // pred_check
      %p91 = pneg %p90
    $region14: #{_grad3d_impl.1} parent=5 // pred_check_branch
      %93 = sbr.rel (%p91) target = $region16
    $region15: #{_grad3d_impl.1} parent=5 // pred_region
      // Predicated region
      $region17: #{_grad3d_impl.1} parent=15 // pred_check
        %p94 = pneg %p41
      $region18: #{_grad3d_impl.1} parent=15 // pred_check_branch
        %96 = sbr.rel (%p94) target = $region20
      $region19: #{_grad3d_impl.1} parent=15 // pred_region
        %s97 = smul.u32 4, %s14
        %p98 = scmp.lt.s32.totalorder %s97, 7
        %s99 = scalar_select %p98, %s97, 7
        %p100 = scmp.lt.s32.totalorder %s15, 0
        %s101 = scalar_select %p100, %s15, 0
        %s102 = smul.addr %s101, 2
        %s103 = smul.addr %s99, 2
        %s104 = sadd.s32 %s102, %s103
        %s105 = smul.addr %s104, 8
        %s106 = scalar_lea.vmem %s0, %s105
        %s107 = smul.u32 4, %s14
      $region20: #{_grad3d_impl.1} parent=15 // pred_fallthru
        _
    $region16: #{_grad3d_impl.1} parent=5 // pred_fallthru
      _
    %p108 = scmp.le.s32.totalorder 1, %s7
    %p109 = scmp.lt.s32.totalorder %s7, 3
    %p110 = pnand %p108, %p109
    %p111 = pneg %p110
    // Predicated region
    $region21: #{_grad3d_impl.1} parent=5 // pred_check
      _
    $region22: #{_grad3d_impl.1} parent=5 // pred_check_branch
      %113 = sbr.rel (%p110) target = $region24
    $region23: #{_grad3d_impl.1} parent=5 // pred_region
      %s114 = ssub.s32 %s7, 1
      %s115 = smul.u32 4, %s16
      %p116 = scmp.lt.s32.totalorder %s115, 7
      %s117 = scalar_select %p116, %s115, 7
      %p118 = scmp.lt.s32.totalorder %s17, 0
      %s119 = scalar_select %p118, %s17, 0
      %s120 = smul.addr %s119, 2
      %s121 = smul.addr %s117, 2
      %s122 = sadd.s32 %s120, %s121
      %s123 = smul.addr %s122, 8
      %s124 = scalar_lea.vmem %s0, %s123
      %p125 = pneg %p47
      %p126 = pneg %p44
      %p127 = pneg %p75
      %p128 = pneg %p72
      %p129 = scmp.lt.s32.totalorder %s16, 1
      %s130 = scalar_select %p129, %s16, 1
      %p131 = scmp.lt.s32.totalorder %s17, 0
      %s132 = scalar_select %p131, %s17, 0
      %s133 = sadd.s32 %s132, %s130
      %s134 = smul.addr %s133, 8
      %s135 = scalar_lea.vmem %s1, %s134
      %s136 = smul.u32 4, %s16
      %p137 = scmp.lt.s32.totalorder %s136, 7
      %s138 = scalar_select %p137, %s136, 7
      %p139 = scmp.lt.s32.totalorder %s17, 0
      %s140 = scalar_select %p139, %s17, 0
      %s141 = smul.addr %s140, 2
      %s142 = smul.addr %s138, 2
      %s143 = sadd.s32 %s141, %s142
      %s144 = smul.addr %s143, 8
      %s145 = scalar_lea.vmem %s0, %s144
      %s146 = smul.u32 4, %s16
      %p147 = scmp.lt.s32.totalorder %s16, 1
      %s148 = scalar_select %p147, %s16, 1
      %p149 = scmp.lt.s32.totalorder %s17, 0
      %s150 = scalar_select %p149, %s17, 0
      %s151 = sadd.s32 %s150, %s148
      %s152 = smul.addr %s151, 8
      %s153 = scalar_lea.vmem %s1, %s152
      %v154 = vld [vmem:[%s145] sm:$0xff]
      %v155 = vld [vmem:[%s145 + $0x8] sm:$0xff]
      %v156 = vld [vmem:[%s145 + $0x10] sm:$0xff]
      %v157 = vld [vmem:[%s145 + $0x18] sm:$0xff]
      %v158 = vld [vmem:[%s145 + $0x20] sm:$0xff]
      %v159 = vld [vmem:[%s145 + $0x28] sm:$0xff]
      %v160 = vld [vmem:[%s145 + $0x30] sm:$0xff]
      %v161 = vld [vmem:[%s145 + $0x38] sm:$0xff]
      %v170 = vrot.slane %v154, 7
      %v171 = vrot.slane %v155, 7
      %v172 = vrot.slane %v156, 7
      %v173 = vrot.slane %v157, 7
      %v174 = vrot.slane %v158, 7
      %v175 = vrot.slane %v159, 7
      %v176 = vrot.slane %v160, 7
      %v177 = vrot.slane %v161, 7
      %v186 = vsub.f32 %v154, %v170
      %v187 = vsub.f32 %v155, %v171
      %v188 = vsub.f32 %v156, %v172
      %v189 = vsub.f32 %v157, %v173
      %v190 = vsub.f32 %v158, %v174
      %v191 = vsub.f32 %v159, %v175
      %v192 = vsub.f32 %v160, %v176
      %v193 = vsub.f32 %v161, %v177
      %v194 = vand.u32 2147483647, %v186
      %v195 = vand.u32 2147483647, %v187
      %v196 = vand.u32 2147483647, %v188
      %v197 = vand.u32 2147483647, %v189
      %v198 = vand.u32 2147483647, %v190
      %v199 = vand.u32 2147483647, %v191
      %v200 = vand.u32 2147483647, %v192
      %v201 = vand.u32 2147483647, %v193
      %v210 = vrot.slane %v194, 1
      %v211 = vrot.slane %v195, 1
      %v212 = vrot.slane %v196, 1
      %v213 = vrot.slane %v197, 1
      %v214 = vrot.slane %v198, 1
      %v215 = vrot.slane %v199, 1
      %v216 = vrot.slane %v200, 1
      %v217 = vrot.slane %v201, 1
      %vm226 = vcmask 1046528
      %v227 = vsel %vm226, %v210, 0.0
      %v228 = vsel %vm226, %v211, 0.0
      %v229 = vadd.f32 %v227, %v228
      %v230 = vsel %vm226, %v212, 0.0
      %v231 = vadd.f32 %v229, %v230
      %v232 = vsel %vm226, %v213, 0.0
      %v233 = vadd.f32 %v231, %v232
      %v234 = vsel %vm226, %v214, 0.0
      %v235 = vadd.f32 %v233, %v234
      %v236 = vsel %vm226, %v215, 0.0
      %v237 = vadd.f32 %v235, %v236
      %v238 = vsel %vm226, %v216, 0.0
      %v239 = vadd.f32 %v237, %v238
      %v240 = vsel %vm226, %v217, 0.0
      %v241 = vadd.f32 %v239, %v240
      %242 = vadd.xlane.f32.xlu0 %v241
      %v243 = vpop.xlane.xlu0 %242
      %v244 = vrot.slane %v243, 4
      %v245 = vadd.f32 %v243, %v244
      %v246 = vrot.slane %v245, 2
      %v247 = vadd.f32 %v245, %v246
      %v248 = vrot.slane %v247, 1
      %v249 = vadd.f32 %v247, %v248
      %s250 = vtos %v249
      %251 = vrot.lane.b32.xlu0 %v154, 16
      %v252 = vpop.permute.xlu0 %251
      %253 = vrot.lane.b32.xlu0 %v155, 16
      %v254 = vpop.permute.xlu0 %253
      %255 = vrot.lane.b32.xlu0 %v156, 16
      %v256 = vpop.permute.xlu0 %255
      %257 = vrot.lane.b32.xlu0 %v157, 16
      %v258 = vpop.permute.xlu0 %257
      %259 = vrot.lane.b32.xlu0 %v158, 16
      %v260 = vpop.permute.xlu0 %259
      %261 = vrot.lane.b32.xlu0 %v159, 16
      %v262 = vpop.permute.xlu0 %261
      %263 = vrot.lane.b32.xlu0 %v160, 16
      %v264 = vpop.permute.xlu0 %263
      %265 = vrot.lane.b32.xlu0 %v161, 16
      %v266 = vpop.permute.xlu0 %265
      %vm267 = vcmask 130048
      %v268 = vsel %vm267, %v252, %v254
      %v269 = vsel %vm267, %v256, %v258
      %v270 = vsel %vm267, %v260, %v262
      %v271 = vsel %vm267, %v264, %v266
      %v280 = vsub.f32 %v154, %v252
      %v281 = vsub.f32 %v155, %v268
      %v282 = vsub.f32 %v156, %v256
      %v283 = vsub.f32 %v157, %v269
      %v284 = vsub.f32 %v158, %v260
      %v285 = vsub.f32 %v159, %v270
      %v286 = vsub.f32 %v160, %v264
      %v287 = vsub.f32 %v161, %v271
      %v288 = vand.u32 2147483647, %v280
      %v289 = vand.u32 2147483647, %v281
      %v290 = vand.u32 2147483647, %v282
      %v291 = vand.u32 2147483647, %v283
      %v292 = vand.u32 2147483647, %v284
      %v293 = vand.u32 2147483647, %v285
      %v294 = vand.u32 2147483647, %v286
      %v295 = vand.u32 2147483647, %v287
      %304 = vrot.lane.b32.xlu0 %v288, 112
      %v305 = vpop.permute.xlu0 %304
      %306 = vrot.lane.b32.xlu0 %v289, 112
      %v307 = vpop.permute.xlu0 %306
      %308 = vrot.lane.b32.xlu0 %v290, 112
      %v309 = vpop.permute.xlu0 %308
      %310 = vrot.lane.b32.xlu0 %v291, 112
      %v311 = vpop.permute.xlu0 %310
      %312 = vrot.lane.b32.xlu0 %v292, 112
      %v313 = vpop.permute.xlu0 %312
      %314 = vrot.lane.b32.xlu0 %v293, 112
      %v315 = vpop.permute.xlu0 %314
      %316 = vrot.lane.b32.xlu0 %v294, 112
      %v317 = vpop.permute.xlu0 %316
      %318 = vrot.lane.b32.xlu0 %v295, 112
      %v319 = vpop.permute.xlu0 %318
      %vm320 = vcmask 916480
      %v321 = vsel %vm320, %v305, %v307
      %v322 = vsel %vm320, %v309, %v311
      %v323 = vsel %vm320, %v313, %v315
      %v324 = vsel %vm320, %v317, %v319
      %v333 = vsel %vm320, %v307, 0.0
      %v334 = vadd.f32 %v321, %v333
      %v335 = vadd.f32 %v334, %v322
      %v336 = vsel %vm320, %v311, 0.0
      %v337 = vadd.f32 %v335, %v336
      %v338 = vadd.f32 %v337, %v323
      %v339 = vsel %vm320, %v315, 0.0
      %v340 = vadd.f32 %v338, %v339
      %v341 = vadd.f32 %v340, %v324
      %v342 = vsel %vm320, %v319, 0.0
      %v343 = vadd.f32 %v341, %v342
      %344 = vadd.xlane.f32.xlu0 %v343
      %v345 = vpop.xlane.xlu0 %344
      %v346 = vrot.slane %v345, 4
      %v347 = vadd.f32 %v345, %v346
      %v348 = vrot.slane %v347, 2
      %v349 = vadd.f32 %v347, %v348
      %v350 = vrot.slane %v349, 1
      %v351 = vadd.f32 %v349, %v350
      %s352 = vtos %v351
      %v353 = vlaneseq
      %v354 = vand.u32 %v353, 127
      %v355 = vadd.s32 %v354, 128
      %vm356 = vcmp.lt.s32.totalorder %v354, 0
      %v357 = vsub.s32 0, %v354
      %v358 = vsel %vm356, %v357, %v354
      %v359 = vshrl.u32 %v358, 4
      %v360 = vand.u32 %v358, 15
      %v361 = vsub.s32 0, %v360
      %v362 = vsel %vm356, %v361, %v360
      %vm363 = vcmp.lt.s32.totalorder %v355, 0
      %v364 = vsub.s32 0, %v355
      %v365 = vsel %vm363, %v364, %v355
      %v366 = vshrl.u32 %v365, 4
      %v367 = vand.u32 %v365, 15
      %v368 = vsub.s32 0, %v367
      %v369 = vsel %vm363, %v368, %v367
      %vm370 = vcmp.ne.s32.totalorder %v362, 0
      %vm371 = vcmp.ne.s32.totalorder %v369, 0
      %vm372 = vcmp.lt.s32.totalorder %v362, 0
      %vm373 = vcmp.lt.s32.totalorder %v369, 0
      %vm374 = vmand %vm372, %vm370
      %vm375 = vmand %vm373, %vm371
      %v376 = vadd.s32 %v362, 16
      %v377 = vadd.s32 %v369, 16
      %v378 = vsel %vm374, %v376, %v362
      %v379 = vsel %vm375, %v377, %v369
      %vm380 = vcmp.ne.s32.totalorder %v378, 15
      %vm381 = vcmp.ne.s32.totalorder %v379, 15
      %382 = vrot.lane.b32.xlu0 %v154, 1
      %v383 = vpop.permute.xlu0 %382
      %384 = vrot.lane.b32.xlu0 %v155, 1
      %v385 = vpop.permute.xlu0 %384
      %386 = vrot.lane.b32.xlu0 %v156, 1
      %v387 = vpop.permute.xlu0 %386
      %388 = vrot.lane.b32.xlu0 %v157, 1
      %v389 = vpop.permute.xlu0 %388
      %390 = vrot.lane.b32.xlu0 %v158, 1
      %v391 = vpop.permute.xlu0 %390
      %392 = vrot.lane.b32.xlu0 %v159, 1
      %v393 = vpop.permute.xlu0 %392
      %394 = vrot.lane.b32.xlu0 %v160, 1
      %v395 = vpop.permute.xlu0 %394
      %396 = vrot.lane.b32.xlu0 %v161, 1
      %v397 = vpop.permute.xlu0 %396
      %vm398 = vcmask 7168
      %v399 = vsel %vm398, %v383, %v385
      %v400 = vsel %vm398, %v387, %v389
      %v401 = vsel %vm398, %v391, %v393
      %v402 = vsel %vm398, %v395, %v397
      %v411 = vsub.f32 %v154, %v383
      %v412 = vsub.f32 %v155, %v399
      %v413 = vsub.f32 %v156, %v387
      %v414 = vsub.f32 %v157, %v400
      %v415 = vsub.f32 %v158, %v391
      %v416 = vsub.f32 %v159, %v401
      %v417 = vsub.f32 %v160, %v395
      %v418 = vsub.f32 %v161, %v402
      %v419 = vand.u32 2147483647, %v411
      %v420 = vand.u32 2147483647, %v412
      %v421 = vand.u32 2147483647, %v413
      %v422 = vand.u32 2147483647, %v414
      %v423 = vand.u32 2147483647, %v415
      %v424 = vand.u32 2147483647, %v416
      %v425 = vand.u32 2147483647, %v417
      %v426 = vand.u32 2147483647, %v418
      %v427 = vsel %vm380, 1, 0
      %v428 = vsel %vm381, 1, 0
      %vm429 = vcmp.eq.s32.totalorder %v427, 1
      %vm430 = vcmp.eq.s32.totalorder %v428, 1
      %439 = vrot.lane.b32.xlu0 %v419, 127
      %v440 = vpop.permute.xlu0 %439
      %441 = vrot.lane.b32.xlu0 %v420, 127
      %v442 = vpop.permute.xlu0 %441
      %443 = vrot.lane.b32.xlu0 %v421, 127
      %v444 = vpop.permute.xlu0 %443
      %445 = vrot.lane.b32.xlu0 %v422, 127
      %v446 = vpop.permute.xlu0 %445
      %447 = vrot.lane.b32.xlu0 %v423, 127
      %v448 = vpop.permute.xlu0 %447
      %449 = vrot.lane.b32.xlu0 %v424, 127
      %v450 = vpop.permute.xlu0 %449
      %451 = vrot.lane.b32.xlu0 %v425, 127
      %v452 = vpop.permute.xlu0 %451
      %453 = vrot.lane.b32.xlu0 %v426, 127
      %v454 = vpop.permute.xlu0 %453
      %vm455 = vcmask 1039360
      %v456 = vsel %vm455, %v440, %v442
      %v457 = vsel %vm455, %v444, %v446
      %v458 = vsel %vm455, %v448, %v450
      %v459 = vsel %vm455, %v452, %v454
      %v468 = vsel %vm429, %v456, 0.0
      %v469 = vsel %vm430, %v442, 0.0
      %v470 = vsel %vm429, %v457, 0.0
      %v471 = vsel %vm430, %v446, 0.0
      %v472 = vsel %vm429, %v458, 0.0
      %v473 = vsel %vm430, %v450, 0.0
      %v474 = vsel %vm429, %v459, 0.0
      %v475 = vsel %vm430, %v454, 0.0
      %v476 = vsel %vm455, %v469, 0.0
      %v477 = vadd.f32 %v468, %v476
      %v478 = vadd.f32 %v477, %v470
      %v479 = vsel %vm455, %v471, 0.0
      %v480 = vadd.f32 %v478, %v479
      %v481 = vadd.f32 %v480, %v472
      %v482 = vsel %vm455, %v473, 0.0
      %v483 = vadd.f32 %v481, %v482
      %v484 = vadd.f32 %v483, %v474
      %v485 = vsel %vm455, %v475, 0.0
      %v486 = vadd.f32 %v484, %v485
      %487 = vadd.xlane.f32.xlu0 %v486
      %v488 = vpop.xlane.xlu0 %487
      %v489 = vrot.slane %v488, 4
      %v490 = vadd.f32 %v488, %v489
      %v491 = vrot.slane %v490, 2
      %v492 = vadd.f32 %v490, %v491
      %v493 = vrot.slane %v492, 1
      %v494 = vadd.f32 %v492, %v493
      %s495 = vtos %v494
      %v496 = vlaneseq
      %v497 = vshrl.u32 %v496, 7
      %vm498 = vcmp.eq.s32.totalorder %v497, 0
      %vm499 = vcmp.eq.s32.totalorder %v497, 1
      %vm500 = vcmp.eq.s32.totalorder %v497, 2
      %v501 = vstv %s495
      %v502 = vsel %vm500, %v501, 0.0
      %v503 = vstv %s352
      %v504 = vsel %vm499, %v503, %v502
      %v505 = vstv %s250
      %v506 = vsel %vm498, %v505, %v504
      %507 = vst [vmem:[%s153] sm:$0xff] %v506
      %p508 = scmp.lt.s32.totalorder %s16, 1
      %s509 = scalar_select %p508, %s16, 1
      %p510 = scmp.lt.s32.totalorder %s17, 0
      %s511 = scalar_select %p510, %s17, 0
      %s512 = sadd.s32 %s511, %s509
      %s513 = smul.addr %s512, 8
      %s514 = scalar_lea.vmem %s1, %s513
      // Predicated region
      $region25: #{_grad3d_impl.1} parent=23 // pred_check
        %p515 = pneg %p72
      $region26: #{_grad3d_impl.1} parent=23 // pred_check_branch
        %517 = sbr.rel (%p515) target = $region28
      $region27: #{_grad3d_impl.1} parent=23 // pred_region
        _
      $region28: #{_grad3d_impl.1} parent=23 // pred_fallthru
        _
    $region24: #{_grad3d_impl.1} parent=5 // pred_fallthru
      _
    %p518 = scmp.le.s32.totalorder 2, %s7
    // Predicated region
    $region29: #{_grad3d_impl.1} parent=5 // pred_check
      %p519 = pneg %p518
    $region30: #{_grad3d_impl.1} parent=5 // pred_check_branch
      %521 = sbr.rel (%p519) target = $region32
    $region31: #{_grad3d_impl.1} parent=5 // pred_region
      %s522 = ssub.s32 %s7, 2
      // Predicated region
      $region33: #{_grad3d_impl.1} parent=31 // pred_check
        %p523 = pneg %p78
      $region34: #{_grad3d_impl.1} parent=31 // pred_check_branch
        %525 = sbr.rel (%p523) target = $region36
      $region35: #{_grad3d_impl.1} parent=31 // pred_region
        %p526 = scmp.lt.s32.totalorder %s18, 1
        %s527 = scalar_select %p526, %s18, 1
        %p528 = scmp.lt.s32.totalorder %s19, 0
        %s529 = scalar_select %p528, %s19, 0
        %s530 = sadd.s32 %s529, %s527
        %s531 = smul.addr %s530, 8
        %s532 = scalar_lea.vmem %s1, %s531
      $region36: #{_grad3d_impl.1} parent=31 // pred_fallthru
        _
    $region32: #{_grad3d_impl.1} parent=5 // pred_fallthru
      _
  $region6: #{_grad3d_impl.1} parent=0 // loop_footer
    %s11 = sadd.s32 1, %s7
  $region7: #{_grad3d_impl.1} parent=0 // loop_footer_branch
    %6 = sbr.rel target = $region3
  $region8: #{_grad3d_impl.1} parent=0 // loop_exit
    _

</llo_original>
